<compile_context>
chip_gen: v7x
topology: tpu7x:2x2x1
jax: 0.10.0
libtpu: 0.0.40
codegen_flags: <defaults>
</compile_context>

<pallas_src>
import functools

import jax
import jax.numpy as jnp
import numpy as np
from jax.experimental import pallas as pl
from jax.experimental.pallas import tpu as pltpu

OUT_PAD = 128  # lane-dense packed decoder / output width


def _samlp_kernel(a_ref, x_ref, wa_ref, ba_ref, wx_ref, bx_ref,
                  wdec_ref, bdec_ref, y_ref, *, out_channels):
    # --- decouple_encoder: bf16 MXU matmuls, f32 accumulation ---------------
    ha = jnp.dot(a_ref[...], wa_ref[...], preferred_element_type=jnp.float32)
    ha = jnp.maximum(ha + ba_ref[...], 0.0)                  # relu(mlpA(A))
    hx = jnp.dot(x_ref[...], wx_ref[...], preferred_element_type=jnp.float32)
    hx = jnp.maximum(hx + bx_ref[...], 0.0)                  # relu(mlpX(X))

    # --- attentive_decoder: one lane-dense fused matmul ---------------------
    # H = [HA | HX]; W_dec packs classifierA / classifierX / attention weights
    # into 128 output lanes so yA / yX / logit come out of a single MXU pass.
    h = jnp.concatenate([ha.astype(wdec_ref.dtype),
                         hx.astype(wdec_ref.dtype)], axis=-1)    # (tile_n, 2*hidden)
    p = jnp.dot(h, wdec_ref[...],
                preferred_element_type=jnp.float32) + bdec_ref[...]  # (tile_n, 128)

    ya = p[:, :out_channels]
    yx = p[:, out_channels:2 * out_channels]
    alpha = jax.nn.sigmoid(p[:, 2 * out_channels:2 * out_channels + 1])
    y = ya * alpha + yx * (1.0 - alpha)                      # (tile_n, out_channels)

    # Lane-dense (128-wide) unmasked store; the wrapper slices the real columns.
    tile_n = y.shape[0]
    y_ref[...] = jnp.concatenate(
        [y, jnp.zeros((tile_n, OUT_PAD - out_channels), jnp.float32)], axis=-1)


def samlp_forward(A, X, params, *, tile_n=256):
    N, num_nodes = A.shape
    _, in_channels = X.shape
    hidden = params["wa"].shape[1]
    out_channels = params["wca"].shape[1]
    assert 2 * out_channels + 1 <= OUT_PAD, "out_channels too large for 128-lane packing"

    # Row-pad so the grid evenly tiles N (padded rows are zero and sliced off).
    n_pad = pl.cdiv(N, tile_n) * tile_n
    if n_pad != N:
        A = jnp.pad(A, ((0, n_pad - N), (0, 0)))
        X = jnp.pad(X, ((0, n_pad - N), (0, 0)))

    bf16 = jnp.bfloat16
    A = A.astype(bf16)
    X = X.astype(bf16)
    wa = params["wa"].astype(bf16)
    wx = params["wx"].astype(bf16)
    ba = params["ba"].astype(jnp.float32)
    bx = params["bx"].astype(jnp.float32)

    # Pack classifierA / classifierX / attention weights into one lane-dense
    # (2*hidden, 128) matrix; the torch.cat([HA, HX]) is folded in here.
    wdec = jnp.zeros((2 * hidden, OUT_PAD), jnp.float32)
    wdec = wdec.at[:hidden, :out_channels].set(params["wca"])
    wdec = wdec.at[hidden:, out_channels:2 * out_channels].set(params["wcx"])
    wdec = wdec.at[:hidden, 2 * out_channels].set(params["watt_a"][:, 0])
    wdec = wdec.at[hidden:, 2 * out_channels].set(params["watt_x"][:, 0])
    wdec = wdec.astype(bf16)

    bdec = jnp.zeros((1, OUT_PAD), jnp.float32)
    bdec = bdec.at[0, :out_channels].set(params["bca"][0])
    bdec = bdec.at[0, out_channels:2 * out_channels].set(params["bcx"][0])
    bdec = bdec.at[0, 2 * out_channels].set(params["batt"][0, 0])

    grid = (n_pad // tile_n,)
    row_spec = lambda last: pl.BlockSpec((tile_n, last), lambda i: (i, 0))
    full_spec = lambda shape: pl.BlockSpec(shape, lambda i: (0, 0))

    flops = int(2 * n_pad * hidden * (num_nodes + in_channels)
                + 2 * n_pad * 2 * hidden * OUT_PAD
                + 8 * n_pad * out_channels)
    bytes_accessed = int(2 * (A.size + X.size + wa.size + wx.size + wdec.size)
                         + 4 * (ba.size + bx.size + bdec.size)
                         + 4 * n_pad * OUT_PAD)

    kernel = functools.partial(_samlp_kernel, out_channels=out_channels)

    y_pad = pl.pallas_call(
        kernel,
        out_shape=jax.ShapeDtypeStruct((n_pad, OUT_PAD), jnp.float32),
        grid_spec=pltpu.PrefetchScalarGridSpec(
            num_scalar_prefetch=0,
            grid=grid,
            in_specs=[
                row_spec(num_nodes),                  # A row tile (bf16)
                row_spec(in_channels),                # X row tile (bf16)
                full_spec((num_nodes, hidden)),       # WA (bf16), resident
                full_spec((1, hidden)),               # bA (f32)
                full_spec((in_channels, hidden)),     # WX (bf16), resident
                full_spec((1, hidden)),               # bX (f32)
                full_spec((2 * hidden, OUT_PAD)),     # packed decoder weights (bf16)
                full_spec((1, OUT_PAD)),              # packed decoder bias (f32)
            ],
            out_specs=pl.BlockSpec((tile_n, OUT_PAD), lambda i: (i, 0)),
        ),
        compiler_params=pltpu.CompilerParams(
            dimension_semantics=("parallel",)),
        cost_estimate=pl.CostEstimate(
            flops=flops,
            transcendentals=int(n_pad),
            bytes_accessed=bytes_accessed),
    )(A, X, wa, ba, wx, bx, wdec, bdec)

    return y_pad[:N, :out_channels]


def init_params(key, num_nodes, in_channels, hidden, out_channels):
    """Deterministic synthetic parameters (PyTorch Linear shapes, pre-transposed)."""
    ks = jax.random.split(key, 10)
    u = lambda k, shape, fan_in: jax.random.uniform(
        k, shape, jnp.float32, -1.0 / np.sqrt(fan_in), 1.0 / np.sqrt(fan_in))
    return dict(
        wa=u(ks[0], (num_nodes, hidden), num_nodes),
        ba=u(ks[1], (1, hidden), num_nodes),
        wx=u(ks[2], (in_channels, hidden), in_channels),
        bx=u(ks[3], (1, hidden), in_channels),
        watt_a=u(ks[4], (hidden, 1), 2 * hidden),
        watt_x=u(ks[5], (hidden, 1), 2 * hidden),
        batt=u(ks[6], (1, 1), 2 * hidden),
        wca=u(ks[7], (hidden, out_channels), hidden),
        bca=u(ks[8], (1, out_channels), hidden),
        wcx=u(ks[9], (hidden, out_channels), hidden),
        bcx=u(jax.random.fold_in(key, 99), (1, out_channels), hidden),
    )


def samlp_reference(A, X, p):
    """Pure-JAX reference at the kernel's precision (bf16 operands, f32 accumulation)."""
    bf16 = jnp.bfloat16
    dot = lambda a, b: jnp.dot(a.astype(bf16), b.astype(bf16),
                               preferred_element_type=jnp.float32)
    ha = jax.nn.relu(dot(A, p["wa"]) + p["ba"])
    hx = jax.nn.relu(dot(X, p["wx"]) + p["bx"])
    ya = dot(ha, p["wca"]) + p["bca"]
    yx = dot(hx, p["wcx"]) + p["bcx"]
    alpha = jax.nn.sigmoid(dot(ha, p["watt_a"]) + dot(hx, p["watt_x"]) + p["batt"])
    return ya * alpha + yx * (1.0 - alpha)


if __name__ == "__main__":
    # Small graph: N = num_nodes = 200 (ragged vs. 128-row tile to exercise padding),
    # 16 input features, hidden 32, 4 output classes.
    N, num_nodes, in_channels, hidden, out_channels = 200, 200, 16, 32, 4

    key = jax.random.PRNGKey(0)
    ka, kx, kp = jax.random.split(key, 3)
    A = jax.random.normal(ka, (N, num_nodes), jnp.float32)
    X = jax.random.normal(kx, (N, in_channels), jnp.float32)
    params = init_params(kp, num_nodes, in_channels, hidden, out_channels)

    y = samlp_forward(A, X, params, tile_n=128)
    y = jax.block_until_ready(y)
    assert y.shape == (N, out_channels)

    y_ref = samlp_reference(A, X, params)
    np.testing.assert_allclose(np.asarray(y), np.asarray(y_ref),
                               rtol=5e-3, atol=5e-3)

    print("KERNEL_OK")
</pallas_src>

<mosaic_0001>
module attributes {stable_mosaic.version = 11 : i64} {
  func.func @_samlp_kernel(%arg0: i32, %arg1: memref<128x200xbf16, #tpu.memory_space<vmem>>, %arg2: memref<128x16xbf16, #tpu.memory_space<vmem>>, %arg3: memref<200x32xbf16, #tpu.memory_space<vmem>>, %arg4: memref<1x32xf32, #tpu.memory_space<vmem>>, %arg5: memref<16x32xbf16, #tpu.memory_space<vmem>>, %arg6: memref<1x32xf32, #tpu.memory_space<vmem>>, %arg7: memref<64x128xbf16, #tpu.memory_space<vmem>>, %arg8: memref<1x128xf32, #tpu.memory_space<vmem>>, %arg9: memref<128x128xf32, #tpu.memory_space<vmem>>) attributes {dimension_semantics = [#tpu.dimension_semantics<parallel>], iteration_bounds = array<i64: 2>, scalar_prefetch = 0 : i64, scratch_operands = 0 : i64, tpu.core_type = #tpu.core_type<tc>, window_params = [{transform_indices = @transform_0, window_bounds = array<i64: 128, 200>}, {transform_indices = @transform_1, window_bounds = array<i64: 128, 16>}, {pipeline_mode = #tpu.pipeline_mode<synchronous>, transform_indices = @transform_2, window_bounds = array<i64: 200, 32>}, {pipeline_mode = #tpu.pipeline_mode<synchronous>, transform_indices = @transform_3, window_bounds = array<i64: 1, 32>}, {pipeline_mode = #tpu.pipeline_mode<synchronous>, transform_indices = @transform_4, window_bounds = array<i64: 16, 32>}, {pipeline_mode = #tpu.pipeline_mode<synchronous>, transform_indices = @transform_5, window_bounds = array<i64: 1, 32>}, {pipeline_mode = #tpu.pipeline_mode<synchronous>, transform_indices = @transform_6, window_bounds = array<i64: 64, 128>}, {pipeline_mode = #tpu.pipeline_mode<synchronous>, transform_indices = @transform_7, window_bounds = array<i64: 1, 128>}, {transform_indices = @transform_8, window_bounds = array<i64: 128, 128>}]} {
    %c0 = arith.constant 0 : index
    %c0_0 = arith.constant 0 : index
    %0 = vector.load %arg1[%c0, %c0_0] : memref<128x200xbf16, #tpu.memory_space<vmem>>, vector<128x200xbf16>
    %c0_1 = arith.constant 0 : index
    %c0_2 = arith.constant 0 : index
    %1 = vector.load %arg3[%c0_1, %c0_2] : memref<200x32xbf16, #tpu.memory_space<vmem>>, vector<200x32xbf16>
    %cst = arith.constant dense<0.000000e+00> : vector<128x32xf32>
    %2 = tpu.matmul %0, %1, %cst {dimension_numbers = #tpu.dot_dimension_numbers<[1], [0], [0], [1], [0, 0, 1, 1], [], []>} : vector<128x200xbf16>, vector<200x32xbf16>, vector<128x32xf32> -> vector<128x32xf32>
    %c0_3 = arith.constant 0 : index
    %c0_4 = arith.constant 0 : index
    %3 = vector.load %arg4[%c0_3, %c0_4] : memref<1x32xf32, #tpu.memory_space<vmem>>, vector<1x32xf32>
    %4 = vector.broadcast %3 : vector<1x32xf32> to vector<128x32xf32>
    %5 = arith.addf %2, %4 : vector<128x32xf32>
    %cst_5 = arith.constant 0.000000e+00 : f32
    %6 = vector.broadcast %cst_5 : f32 to vector<128x32xf32>
    %7 = arith.maximumf %5, %6 : vector<128x32xf32>
    %c0_6 = arith.constant 0 : index
    %c0_7 = arith.constant 0 : index
    %8 = vector.load %arg2[%c0_6, %c0_7] : memref<128x16xbf16, #tpu.memory_space<vmem>>, vector<128x16xbf16>
    %c0_8 = arith.constant 0 : index
    %c0_9 = arith.constant 0 : index
    %9 = vector.load %arg5[%c0_8, %c0_9] : memref<16x32xbf16, #tpu.memory_space<vmem>>, vector<16x32xbf16>
    %cst_10 = arith.constant dense<0.000000e+00> : vector<128x32xf32>
    %10 = tpu.matmul %8, %9, %cst_10 {dimension_numbers = #tpu.dot_dimension_numbers<[1], [0], [0], [1], [0, 0, 1, 1], [], []>} : vector<128x16xbf16>, vector<16x32xbf16>, vector<128x32xf32> -> vector<128x32xf32>
    %c0_11 = arith.constant 0 : index
    %c0_12 = arith.constant 0 : index
    %11 = vector.load %arg6[%c0_11, %c0_12] : memref<1x32xf32, #tpu.memory_space<vmem>>, vector<1x32xf32>
    %12 = vector.broadcast %11 : vector<1x32xf32> to vector<128x32xf32>
    %13 = arith.addf %10, %12 : vector<128x32xf32>
    %cst_13 = arith.constant 0.000000e+00 : f32
    %14 = vector.broadcast %cst_13 : f32 to vector<128x32xf32>
    %15 = arith.maximumf %13, %14 : vector<128x32xf32>
    %16 = arith.truncf %7 : vector<128x32xf32> to vector<128x32xbf16>
    %17 = arith.truncf %15 : vector<128x32xf32> to vector<128x32xbf16>
    %18 = tpu.concatenate %16, %17 in 1 : vector<128x32xbf16>, vector<128x32xbf16> -> vector<128x64xbf16>
    %c0_14 = arith.constant 0 : index
    %c0_15 = arith.constant 0 : index
    %19 = vector.load %arg7[%c0_14, %c0_15] : memref<64x128xbf16, #tpu.memory_space<vmem>>, vector<64x128xbf16>
    %cst_16 = arith.constant dense<0.000000e+00> : vector<128x128xf32>
    %20 = tpu.matmul %18, %19, %cst_16 {dimension_numbers = #tpu.dot_dimension_numbers<[1], [0], [0], [1], [0, 0, 1, 1], [], []>} : vector<128x64xbf16>, vector<64x128xbf16>, vector<128x128xf32> -> vector<128x128xf32>
    %c0_17 = arith.constant 0 : index
    %c0_18 = arith.constant 0 : index
    %21 = vector.load %arg8[%c0_17, %c0_18] : memref<1x128xf32, #tpu.memory_space<vmem>>, vector<1x128xf32>
    %22 = vector.broadcast %21 : vector<1x128xf32> to vector<128x128xf32>
    %23 = arith.addf %20, %22 : vector<128x128xf32>
    %24 = vector.extract_strided_slice %23 {offsets = [0, 0], sizes = [128, 4], strides = [1, 1]} : vector<128x128xf32> to vector<128x4xf32>
    %25 = vector.extract_strided_slice %23 {offsets = [0, 4], sizes = [128, 4], strides = [1, 1]} : vector<128x128xf32> to vector<128x4xf32>
    %26 = vector.extract_strided_slice %23 {offsets = [0, 8], sizes = [128, 1], strides = [1, 1]} : vector<128x128xf32> to vector<128x1xf32>
    %27 = arith.negf %26 : vector<128x1xf32>
    %28 = math.exp %27 : vector<128x1xf32>
    %cst_19 = arith.constant 1.000000e+00 : f32
    %29 = vector.broadcast %cst_19 : f32 to vector<128x1xf32>
    %30 = arith.addf %29, %28 : vector<128x1xf32>
    %31 = arith.divf %29, %30 : vector<128x1xf32>
    %32 = vector.broadcast %31 : vector<128x1xf32> to vector<128x4xf32>
    %33 = arith.mulf %24, %32 : vector<128x4xf32>
    %cst_20 = arith.constant 1.000000e+00 : f32
    %34 = vector.broadcast %cst_20 : f32 to vector<128x1xf32>
    %35 = arith.subf %34, %31 : vector<128x1xf32>
    %36 = vector.broadcast %35 : vector<128x1xf32> to vector<128x4xf32>
    %37 = arith.mulf %25, %36 : vector<128x4xf32>
    %38 = arith.addf %33, %37 : vector<128x4xf32>
    %cst_21 = arith.constant 0.000000e+00 : f32
    %39 = vector.broadcast %cst_21 : f32 to vector<128x124xf32>
    %40 = tpu.concatenate %38, %39 in 1 : vector<128x4xf32>, vector<128x124xf32> -> vector<128x128xf32>
    %c0_22 = arith.constant 0 : index
    %c0_23 = arith.constant 0 : index
    %41 = vector.load %arg9[%c0_22, %c0_23] : memref<128x128xf32, #tpu.memory_space<vmem>>, vector<128x128xf32>
    tpu.vector_store %arg9[%c0_22, %c0_23], %40 {strides = array<i32>} : memref<128x128xf32, #tpu.memory_space<vmem>>, vector<128x128xf32>,
    return
  }
  func.func @transform_0(%arg0: i32) -> (i32, i32) {
    %c0_i32 = arith.constant 0 : i32
    %c0_i32_0 = arith.constant 0 : i32
    return %arg0, %c0_i32 : i32, i32
  }
  func.func @transform_1(%arg0: i32) -> (i32, i32) {
    %c0_i32 = arith.constant 0 : i32
    %c0_i32_0 = arith.constant 0 : i32
    return %arg0, %c0_i32 : i32, i32
  }
  func.func @transform_2(%arg0: i32) -> (i32, i32) {
    %c0_i32 = arith.constant 0 : i32
    %c0_i32_0 = arith.constant 0 : i32
    %c0_i32_1 = arith.constant 0 : i32
    return %c0_i32, %c0_i32_0 : i32, i32
  }
  func.func @transform_3(%arg0: i32) -> (i32, i32) {
    %c0_i32 = arith.constant 0 : i32
    %c0_i32_0 = arith.constant 0 : i32
    %c0_i32_1 = arith.constant 0 : i32
    return %c0_i32, %c0_i32_0 : i32, i32
  }
  func.func @transform_4(%arg0: i32) -> (i32, i32) {
    %c0_i32 = arith.constant 0 : i32
    %c0_i32_0 = arith.constant 0 : i32
    %c0_i32_1 = arith.constant 0 : i32
    return %c0_i32, %c0_i32_0 : i32, i32
  }
  func.func @transform_5(%arg0: i32) -> (i32, i32) {
    %c0_i32 = arith.constant 0 : i32
    %c0_i32_0 = arith.constant 0 : i32
    %c0_i32_1 = arith.constant 0 : i32
    return %c0_i32, %c0_i32_0 : i32, i32
  }
  func.func @transform_6(%arg0: i32) -> (i32, i32) {
    %c0_i32 = arith.constant 0 : i32
    %c0_i32_0 = arith.constant 0 : i32
    %c0_i32_1 = arith.constant 0 : i32
    return %c0_i32, %c0_i32_0 : i32, i32
  }
  func.func @transform_7(%arg0: i32) -> (i32, i32) {
    %c0_i32 = arith.constant 0 : i32
    %c0_i32_0 = arith.constant 0 : i32
    %c0_i32_1 = arith.constant 0 : i32
    return %c0_i32, %c0_i32_0 : i32, i32
  }
  func.func @transform_8(%arg0: i32) -> (i32, i32) {
    %c0_i32 = arith.constant 0 : i32
    %c0_i32_0 = arith.constant 0 : i32
    return %arg0, %c0_i32 : i32, i32
  }
}

</mosaic_0001>

<llo_original>
// kernel: tpu_custom_call.1
$region0: #{tpu_custom_call.1}
  #allocation0 [shape = 'u32[]', space=smem, size = 0x4, offset = 0x4, fixed_abs, tag = 'smem constant byte address 0x4 - core index']
  #allocation1 [shape = 'u32[144,128]{1,0:T(1,128)}', space=vmem, size = 0x12000, scoped, tag = 'internal scratch']
  %s0 = inlined_call_operand.vmem [shape: bf16[256,200], index: 0, kind: input, shape index: {}]
  %s1 = inlined_call_operand.vmem [shape: bf16[256,16], index: 1, kind: input, shape index: {}]
  %s2 = inlined_call_operand.vmem [shape: bf16[200,32], index: 2, kind: input, shape index: {}]
  %s3 = inlined_call_operand.vmem [shape: f32[1,32], index: 3, kind: input, shape index: {}]
  %s4 = inlined_call_operand.vmem [shape: bf16[16,32], index: 4, kind: input, shape index: {}]
  %s5 = inlined_call_operand.vmem [shape: f32[1,32], index: 5, kind: input, shape index: {}]
  %s6 = inlined_call_operand.vmem [shape: bf16[64,128], index: 6, kind: input, shape index: {}]
  %s7 = inlined_call_operand.vmem [shape: f32[1,128], index: 7, kind: input, shape index: {}]
  %s8 = inlined_call_operand.hbm [shape: f32[256,128], index: 8, kind: output, shape index: {}]
  %s9 = sld [smem:[#allocation0]]
  $region65: #{tpu_custom_call.1} parent=0
    _
  %s11 = ssub.s32 1, %s9
  %s12 = scalar_select 0, %s11, %s9
  $region1: #{tpu_custom_call.1} parent=0
    #allocation2 [shape = 'u8[131072]{0}', space=vmem, size = 0x20000, scoped, tag = 'output window, operand 0']
    #allocation3 [shape = 's32[2]{0}', space=sflag, size = 0x8, scoped, tag = 'scoped memory for tpu_custom_call.1']
    %13 = vsyncpa [#allocation3], 0
    %s14 = scalar_lea.sflag [#allocation3], 1
    %15 = vsyncpa %s14, 0
    loop: start=0, step=1, limit=4
    $region2: #{tpu_custom_call.1} parent=1 // loop_pre_header
      _
    $region3: #{tpu_custom_call.1} parent=1 // loop_header
      %s17 = sphi 0, %s21
      %p18 = scmp.ge.s32.totalorder %s17, 4
      %s27 = sphi 0, %s29
      %s30 = sphi 0, %s27
      %s31 = sphi 0, %s30
      %s47 = sphi 0, %s31
      %s53 = sphi 0, %s55
      %s56 = sphi 0, %s53
      %s57 = sphi 0, %s56
      %s73 = sphi 0, %s57
      %s77 = sphi 0, %s77
      %s79 = sphi 0, %s77
      %s80 = sphi 0, %s79
      %s94 = sphi 0, %s80
      %s98 = sphi 0, %s98
      %s100 = sphi 0, %s98
      %s101 = sphi 0, %s100
      %s115 = sphi 0, %s101
      %s119 = sphi 0, %s119
      %s121 = sphi 0, %s119
      %s122 = sphi 0, %s121
      %s136 = sphi 0, %s122
      %s140 = sphi 0, %s140
      %s142 = sphi 0, %s140
      %s143 = sphi 0, %s142
      %s157 = sphi 0, %s143
      %s161 = sphi 0, %s161
      %s163 = sphi 0, %s161
      %s164 = sphi 0, %s163
      %s178 = sphi 0, %s164
      %s182 = sphi 0, %s182
      %s184 = sphi 0, %s182
      %s185 = sphi 0, %s184
      %s199 = sphi 0, %s185
      %s205 = sphi 0, %s207
      %s208 = sphi 0, %s205
      %s209 = sphi 0, %s208
      %s225 = sphi 0, %s209
    $region4: #{tpu_custom_call.1} parent=1 // loop_header_branch
      %20 = sbr.rel (%p18) target = $region8
    $region5: #{tpu_custom_call.1} parent=1 // loop_body
      %s22 = ssub.s32 %s17, 1
      %s23 = ssub.s32 %s17, 2
      %s24 = sadd.s32 %s17, 1
      %s25 = ssub.s32 %s17, %s24
      %p26 = scmp.eq.s32.totalorder %s25, 0
      %s28 = sadd.s32 %s27, 1
      %s29 = scalar_select %p26, %s27, %s28
      %p32 = pneg %p26
      %p33 = scmp.eq.s32.totalorder %s17, 1
      %p34 = por %p32, %p33
      %p35 = scmp.ne.s32.totalorder %s27, %s30
      %p36 = scmp.eq.s32.totalorder %s17, 0
      %p37 = por %p35, %p36
      %p38 = scmp.ne.s32.totalorder %s27, %s30
      %p39 = scmp.eq.s32.totalorder %s22, 1
      %p40 = por %p38, %p39
      %p41 = scmp.ne.s32.totalorder %s30, %s31
      %p42 = scmp.eq.s32.totalorder %s22, 0
      %p43 = por %p41, %p42
      %p44 = scmp.ne.s32.totalorder %s30, %s31
      %p45 = scmp.eq.s32.totalorder %s23, 1
      %p46 = por %p44, %p45
      %p48 = scmp.ne.s32.totalorder %s31, %s47
      %p49 = scmp.eq.s32.totalorder %s23, 0
      %p50 = por %p48, %p49
      %s51 = ssub.s32 %s17, %s24
      %p52 = scmp.eq.s32.totalorder %s51, 0
      %s54 = sadd.s32 %s53, 1
      %s55 = scalar_select %p52, %s53, %s54
      %p58 = pneg %p52
      %p59 = scmp.eq.s32.totalorder %s17, 1
      %p60 = por %p58, %p59
      %p61 = scmp.ne.s32.totalorder %s53, %s56
      %p62 = scmp.eq.s32.totalorder %s17, 0
      %p63 = por %p61, %p62
      %p64 = scmp.ne.s32.totalorder %s53, %s56
      %p65 = scmp.eq.s32.totalorder %s22, 1
      %p66 = por %p64, %p65
      %p67 = scmp.ne.s32.totalorder %s56, %s57
      %p68 = scmp.eq.s32.totalorder %s22, 0
      %p69 = por %p67, %p68
      %p70 = scmp.ne.s32.totalorder %s56, %s57
      %p71 = scmp.eq.s32.totalorder %s23, 1
      %p72 = por %p70, %p71
      %p74 = scmp.ne.s32.totalorder %s57, %s73
      %p75 = scmp.eq.s32.totalorder %s23, 0
      %p76 = por %p74, %p75
      %s78 = sadd.s32 %s77, 1
      %p81 = scmp.eq.s32.totalorder %s17, 1
      %p82 = scmp.ne.s32.totalorder %s77, %s79
      %p83 = scmp.eq.s32.totalorder %s17, 0
      %p84 = por %p82, %p83
      %p85 = scmp.ne.s32.totalorder %s77, %s79
      %p86 = scmp.eq.s32.totalorder %s22, 1
      %p87 = por %p85, %p86
      %p88 = scmp.ne.s32.totalorder %s79, %s80
      %p89 = scmp.eq.s32.totalorder %s22, 0
      %p90 = por %p88, %p89
      %p91 = scmp.ne.s32.totalorder %s79, %s80
      %p92 = scmp.eq.s32.totalorder %s23, 1
      %p93 = por %p91, %p92
      %p95 = scmp.ne.s32.totalorder %s80, %s94
      %p96 = scmp.eq.s32.totalorder %s23, 0
      %p97 = por %p95, %p96
      %s99 = sadd.s32 %s98, 1
      %p102 = scmp.eq.s32.totalorder %s17, 1
      %p103 = scmp.ne.s32.totalorder %s98, %s100
      %p104 = scmp.eq.s32.totalorder %s17, 0
      %p105 = por %p103, %p104
      %p106 = scmp.ne.s32.totalorder %s98, %s100
      %p107 = scmp.eq.s32.totalorder %s22, 1
      %p108 = por %p106, %p107
      %p109 = scmp.ne.s32.totalorder %s100, %s101
      %p110 = scmp.eq.s32.totalorder %s22, 0
      %p111 = por %p109, %p110
      %p112 = scmp.ne.s32.totalorder %s100, %s101
      %p113 = scmp.eq.s32.totalorder %s23, 1
      %p114 = por %p112, %p113
      %p116 = scmp.ne.s32.totalorder %s101, %s115
      %p117 = scmp.eq.s32.totalorder %s23, 0
      %p118 = por %p116, %p117
      %s120 = sadd.s32 %s119, 1
      %p123 = scmp.eq.s32.totalorder %s17, 1
      %p124 = scmp.ne.s32.totalorder %s119, %s121
      %p125 = scmp.eq.s32.totalorder %s17, 0
      %p126 = por %p124, %p125
      %p127 = scmp.ne.s32.totalorder %s119, %s121
      %p128 = scmp.eq.s32.totalorder %s22, 1
      %p129 = por %p127, %p128
      %p130 = scmp.ne.s32.totalorder %s121, %s122
      %p131 = scmp.eq.s32.totalorder %s22, 0
      %p132 = por %p130, %p131
      %p133 = scmp.ne.s32.totalorder %s121, %s122
      %p134 = scmp.eq.s32.totalorder %s23, 1
      %p135 = por %p133, %p134
      %p137 = scmp.ne.s32.totalorder %s122, %s136
      %p138 = scmp.eq.s32.totalorder %s23, 0
      %p139 = por %p137, %p138
      %s141 = sadd.s32 %s140, 1
      %p144 = scmp.eq.s32.totalorder %s17, 1
      %p145 = scmp.ne.s32.totalorder %s140, %s142
      %p146 = scmp.eq.s32.totalorder %s17, 0
      %p147 = por %p145, %p146
      %p148 = scmp.ne.s32.totalorder %s140, %s142
      %p149 = scmp.eq.s32.totalorder %s22, 1
      %p150 = por %p148, %p149
      %p151 = scmp.ne.s32.totalorder %s142, %s143
      %p152 = scmp.eq.s32.totalorder %s22, 0
      %p153 = por %p151, %p152
      %p154 = scmp.ne.s32.totalorder %s142, %s143
      %p155 = scmp.eq.s32.totalorder %s23, 1
      %p156 = por %p154, %p155
      %p158 = scmp.ne.s32.totalorder %s143, %s157
      %p159 = scmp.eq.s32.totalorder %s23, 0
      %p160 = por %p158, %p159
      %s162 = sadd.s32 %s161, 1
      %p165 = scmp.eq.s32.totalorder %s17, 1
      %p166 = scmp.ne.s32.totalorder %s161, %s163
      %p167 = scmp.eq.s32.totalorder %s17, 0
      %p168 = por %p166, %p167
      %p169 = scmp.ne.s32.totalorder %s161, %s163
      %p170 = scmp.eq.s32.totalorder %s22, 1
      %p171 = por %p169, %p170
      %p172 = scmp.ne.s32.totalorder %s163, %s164
      %p173 = scmp.eq.s32.totalorder %s22, 0
      %p174 = por %p172, %p173
      %p175 = scmp.ne.s32.totalorder %s163, %s164
      %p176 = scmp.eq.s32.totalorder %s23, 1
      %p177 = por %p175, %p176
      %p179 = scmp.ne.s32.totalorder %s164, %s178
      %p180 = scmp.eq.s32.totalorder %s23, 0
      %p181 = por %p179, %p180
      %s183 = sadd.s32 %s182, 1
      %p186 = scmp.eq.s32.totalorder %s17, 1
      %p187 = scmp.ne.s32.totalorder %s182, %s184
      %p188 = scmp.eq.s32.totalorder %s17, 0
      %p189 = por %p187, %p188
      %p190 = scmp.ne.s32.totalorder %s182, %s184
      %p191 = scmp.eq.s32.totalorder %s22, 1
      %p192 = por %p190, %p191
      %p193 = scmp.ne.s32.totalorder %s184, %s185
      %p194 = scmp.eq.s32.totalorder %s22, 0
      %p195 = por %p193, %p194
      %p196 = scmp.ne.s32.totalorder %s184, %s185
      %p197 = scmp.eq.s32.totalorder %s23, 1
      %p198 = por %p196, %p197
      %p200 = scmp.ne.s32.totalorder %s185, %s199
      %p201 = scmp.eq.s32.totalorder %s23, 0
      %p202 = por %p200, %p201
      %s203 = ssub.s32 %s17, %s24
      %p204 = scmp.eq.s32.totalorder %s203, 0
      %s206 = sadd.s32 %s205, 1
      %s207 = scalar_select %p204, %s205, %s206
      %p210 = pneg %p204
      %p211 = scmp.eq.s32.totalorder %s17, 1
      %p212 = por %p210, %p211
      %p213 = scmp.ne.s32.totalorder %s205, %s208
      %p214 = scmp.eq.s32.totalorder %s17, 0
      %p215 = por %p213, %p214
      %p216 = scmp.ne.s32.totalorder %s205, %s208
      %p217 = scmp.eq.s32.totalorder %s22, 1
      %p218 = por %p216, %p217
      %p219 = scmp.ne.s32.totalorder %s208, %s209
      %p220 = scmp.eq.s32.totalorder %s22, 0
      %p221 = por %p219, %p220
      %p222 = scmp.ne.s32.totalorder %s208, %s209
      %p223 = scmp.eq.s32.totalorder %s23, 1
      %p224 = por %p222, %p223
      %p226 = scmp.ne.s32.totalorder %s209, %s225
      %p227 = scmp.eq.s32.totalorder %s23, 0
      %p228 = por %p226, %p227
      %p229 = scmp.le.s32.totalorder 1, %s17
      %p230 = scmp.lt.s32.totalorder %s17, 3
      %p231 = pnand %p229, %p230
      %p232 = pneg %p231
      // Predicated region
      $region9: #{tpu_custom_call.1} parent=5 // pred_check
        _
      $region10: #{tpu_custom_call.1} parent=5 // pred_check_branch
        %234 = sbr.rel (%p231) target = $region12
      $region11: #{tpu_custom_call.1} parent=5 // pred_region
        %s235 = ssub.s32 %s17, 1
        // Predicated region
        $region13: #{tpu_custom_call.1} parent=11 // pred_check
          %p236 = pneg %p90
        $region14: #{tpu_custom_call.1} parent=11 // pred_check_branch
          %238 = sbr.rel (%p236) target = $region16
        $region15: #{tpu_custom_call.1} parent=11 // pred_region
          _
        $region16: #{tpu_custom_call.1} parent=11 // pred_fallthru
          _
        // Predicated region
        $region17: #{tpu_custom_call.1} parent=11 // pred_check
          %p239 = pneg %p111
        $region18: #{tpu_custom_call.1} parent=11 // pred_check_branch
          %241 = sbr.rel (%p239) target = $region20
        $region19: #{tpu_custom_call.1} parent=11 // pred_region
          _
        $region20: #{tpu_custom_call.1} parent=11 // pred_fallthru
          _
        // Predicated region
        $region21: #{tpu_custom_call.1} parent=11 // pred_check
          %p242 = pneg %p132
        $region22: #{tpu_custom_call.1} parent=11 // pred_check_branch
          %244 = sbr.rel (%p242) target = $region24
        $region23: #{tpu_custom_call.1} parent=11 // pred_region
          _
        $region24: #{tpu_custom_call.1} parent=11 // pred_fallthru
          _
        // Predicated region
        $region25: #{tpu_custom_call.1} parent=11 // pred_check
          %p245 = pneg %p153
        $region26: #{tpu_custom_call.1} parent=11 // pred_check_branch
          %247 = sbr.rel (%p245) target = $region28
        $region27: #{tpu_custom_call.1} parent=11 // pred_region
          _
        $region28: #{tpu_custom_call.1} parent=11 // pred_fallthru
          _
        // Predicated region
        $region29: #{tpu_custom_call.1} parent=11 // pred_check
          %p248 = pneg %p174
        $region30: #{tpu_custom_call.1} parent=11 // pred_check_branch
          %250 = sbr.rel (%p248) target = $region32
        $region31: #{tpu_custom_call.1} parent=11 // pred_region
          _
        $region32: #{tpu_custom_call.1} parent=11 // pred_fallthru
          _
        // Predicated region
        $region33: #{tpu_custom_call.1} parent=11 // pred_check
          %p251 = pneg %p195
        $region34: #{tpu_custom_call.1} parent=11 // pred_check_branch
          %253 = sbr.rel (%p251) target = $region36
        $region35: #{tpu_custom_call.1} parent=11 // pred_region
          _
        $region36: #{tpu_custom_call.1} parent=11 // pred_fallthru
          _
      $region12: #{tpu_custom_call.1} parent=5 // pred_fallthru
        _
      %p254 = scmp.lt.s32.totalorder %s17, 2
      // Predicated region
      $region37: #{tpu_custom_call.1} parent=5 // pred_check
        %p255 = pneg %p254
      $region38: #{tpu_custom_call.1} parent=5 // pred_check_branch
        %257 = sbr.rel (%p255) target = $region40
      $region39: #{tpu_custom_call.1} parent=5 // pred_region
        // Predicated region
        $region41: #{tpu_custom_call.1} parent=39 // pred_check
          %p258 = pneg %p37
        $region42: #{tpu_custom_call.1} parent=39 // pred_check_branch
          %260 = sbr.rel (%p258) target = $region44
        $region43: #{tpu_custom_call.1} parent=39 // pred_region
          %s261 = smul.u32 16, %s17
          %p262 = scmp.lt.s32.totalorder %s261, 31
          %s263 = scalar_select %p262, %s261, 31
          %s264 = smul.addr %s263, 2
          %s265 = smul.addr %s264, 4
          %s266 = scalar_lea.vmem %s0, %s265
          %s267 = smul.u32 16, %s17
        $region44: #{tpu_custom_call.1} parent=39 // pred_fallthru
          _
        // Predicated region
        $region45: #{tpu_custom_call.1} parent=39 // pred_check
          %p268 = pneg %p63
        $region46: #{tpu_custom_call.1} parent=39 // pred_check_branch
          %270 = sbr.rel (%p268) target = $region48
        $region47: #{tpu_custom_call.1} parent=39 // pred_region
          %s271 = smul.u32 16, %s17
          %p272 = scmp.lt.s32.totalorder %s271, 31
          %s273 = scalar_select %p272, %s271, 31
          %s274 = smul.addr %s273, 4
          %s275 = scalar_lea.vmem %s1, %s274
          %s276 = smul.u32 16, %s17
        $region48: #{tpu_custom_call.1} parent=39 // pred_fallthru
          _
      $region40: #{tpu_custom_call.1} parent=5 // pred_fallthru
        _
      %p277 = scmp.le.s32.totalorder 1, %s17
      %p278 = scmp.lt.s32.totalorder %s17, 3
      %p279 = pnand %p277, %p278
      %p280 = pneg %p279
      // Predicated region
      $region49: #{tpu_custom_call.1} parent=5 // pred_check
        _
      $region50: #{tpu_custom_call.1} parent=5 // pred_check_branch
        %282 = sbr.rel (%p279) target = $region52
      $region51: #{tpu_custom_call.1} parent=5 // pred_region
        %s283 = ssub.s32 %s17, 1
        %s284 = smul.u32 16, %s22
        %p285 = scmp.lt.s32.totalorder %s284, 31
        %s286 = scalar_select %p285, %s284, 31
        %s287 = smul.addr %s286, 2
        %s288 = smul.addr %s287, 4
        %s289 = scalar_lea.vmem %s0, %s288
        %p290 = pneg %p43
        %p291 = pneg %p40
        %s292 = smul.u32 16, %s22
        %p293 = scmp.lt.s32.totalorder %s292, 31
        %s294 = scalar_select %p293, %s292, 31
        %s295 = smul.addr %s294, 4
        %s296 = scalar_lea.vmem %s1, %s295
        %p297 = pneg %p69
        %p298 = pneg %p66
        %p299 = pneg %p90
        %p300 = pneg %p87
        %p301 = pneg %p111
        %p302 = pneg %p108
        %p303 = pneg %p132
        %p304 = pneg %p129
        %p305 = pneg %p153
        %p306 = pneg %p150
        %p307 = pneg %p174
        %p308 = pneg %p171
        %p309 = pneg %p195
        %p310 = pneg %p192
        %p311 = pneg %p221
        %p312 = pneg %p218
        %s313 = sand.u32 %s208, 1
        %s314 = scalar_lea.sflag [#allocation3], %s313
        %s315 = sand.u32 %s208, 1
        %s316 = smul.addr %s315, 128
        %s317 = scalar_lea.vmem [#allocation2], %s316
        %s318 = smul.u32 16, %s22
        %p319 = scmp.lt.s32.totalorder %s318, 31
        %s320 = scalar_select %p319, %s318, 31
        %s321 = smul.addr %s320, 2
        %s322 = smul.addr %s321, 4
        %s323 = scalar_lea.vmem %s0, %s322
        %s324 = smul.u32 16, %s22
        %s325 = smul.u32 16, %s22
        %p326 = scmp.lt.s32.totalorder %s325, 31
        %s327 = scalar_select %p326, %s325, 31
        %s328 = smul.addr %s327, 4
        %s329 = scalar_lea.vmem %s1, %s328
        %s330 = smul.u32 16, %s22
        %s331 = smul.u32 16, %s22
        %v333 = vld [vmem:[%s323] sm:$0xff]
        %v334 = vld [vmem:[%s323 + $0x8] sm:$0xff]
        %v335 = vld [vmem:[%s323 + $0x10] sm:$0xff]
        %v336 = vld [vmem:[%s323 + $0x18] sm:$0xff]
        %v337 = vld [vmem:[%s323 + $0x20] sm:$0xff]
        %v338 = vld [vmem:[%s323 + $0x28] sm:$0xff]
        %v339 = vld [vmem:[%s323 + $0x30] sm:$0xff]
        %v340 = vld [vmem:[%s323 + $0x38] sm:$0xff]
        %v341 = vld [vmem:[%s323 + $0x40] sm:$0xff]
        %v342 = vld [vmem:[%s323 + $0x48] sm:$0xff]
        %v343 = vld [vmem:[%s323 + $0x50] sm:$0xff]
        %v344 = vld [vmem:[%s323 + $0x58] sm:$0xff]
        %v345 = vld [vmem:[%s323 + $0x60] sm:$0xff]
        %v346 = vld [vmem:[%s323 + $0x68] sm:$0xff]
        %v347 = vld [vmem:[%s323 + $0x70] sm:$0xff]
        %v348 = vld [vmem:[%s323 + $0x78] sm:$0xff]
        %v349 = vld [vmem:[%s2] sm:$0xf]
        %v350 = vld [vmem:[%s2 + $0x4] sm:$0xf]
        %v351 = vld [vmem:[%s2 + $0x8] sm:$0xf]
        %v352 = vld [vmem:[%s2 + $0xc] sm:$0xf]
        %v353 = vld [vmem:[%s2 + $0x10] sm:$0xf]
        %v354 = vld [vmem:[%s2 + $0x14] sm:$0xf]
        %v355 = vld [vmem:[%s2 + $0x18] sm:$0xf]
        %v356 = vld [vmem:[%s2 + $0x1c] sm:$0xf]
        %v357 = vld [vmem:[%s2 + $0x20] sm:$0xf]
        %v358 = vld [vmem:[%s2 + $0x24] sm:$0xf]
        %v359 = vld [vmem:[%s2 + $0x28] sm:$0xf]
        %v360 = vld [vmem:[%s2 + $0x2c] sm:$0xf]
        %v361 = vld [vmem:[%s2 + $0x30] sm:$0xf]
        %v362 = vld [vmem:[%s2 + $0x34] sm:$0xf]
        %v363 = vld [vmem:[%s2 + $0x38] sm:$0xf]
        %v364 = vld [vmem:[%s2 + $0x3c] sm:$0xf]
        %v365 = vld [vmem:[%s2 + $0x40] sm:$0xf]
        %v366 = vld [vmem:[%s2 + $0x44] sm:$0xf]
        %v367 = vld [vmem:[%s2 + $0x48] sm:$0xf]
        %v368 = vld [vmem:[%s2 + $0x4c] sm:$0xf]
        %v369 = vld [vmem:[%s2 + $0x50] sm:$0xf]
        %v370 = vld [vmem:[%s2 + $0x54] sm:$0xf]
        %v371 = vld [vmem:[%s2 + $0x58] sm:$0xf]
        %v372 = vld [vmem:[%s2 + $0x5c] sm:$0xf]
        %v373 = vld [vmem:[%s2 + $0x60] sm:$0xf]
        %v374 = vld [vmem:[%s3] sm:$0x1]
        %v376 = vlaneseq
        %v377 = vshrl.u32 %v376, 7
        %v378 = vsub.s32 0, %v377
        %v379 = vrot.slane %v374, %v378
        %v397 = vunpack.c.l.b16 %v333
        %v398 = vunpack.c.h.b16 %v333
        %v399 = vunpack.c.l.b16 %v334
        %v400 = vunpack.c.h.b16 %v334
        %v401 = vunpack.c.l.b16 %v335
        %v402 = vunpack.c.h.b16 %v335
        %v403 = vunpack.c.l.b16 %v336
        %v404 = vunpack.c.h.b16 %v336
        %v405 = vunpack.c.l.b16 %v337
        %v406 = vunpack.c.h.b16 %v337
        %v407 = vunpack.c.l.b16 %v338
        %v408 = vunpack.c.h.b16 %v338
        %v409 = vunpack.c.l.b16 %v339
        %v410 = vunpack.c.h.b16 %v339
        %v411 = vunpack.c.l.b16 %v340
        %v412 = vunpack.c.h.b16 %v340
        %v413 = vunpack.c.l.b16 %v341
        %v414 = vunpack.c.h.b16 %v341
        %v415 = vunpack.c.l.b16 %v342
        %v416 = vunpack.c.h.b16 %v342
        %v417 = vunpack.c.l.b16 %v343
        %v418 = vunpack.c.h.b16 %v343
        %v419 = vunpack.c.l.b16 %v344
        %v420 = vunpack.c.h.b16 %v344
        %v421 = vunpack.c.l.b16 %v345
        %v422 = vunpack.c.h.b16 %v345
        %v423 = vunpack.c.l.b16 %v346
        %v424 = vunpack.c.h.b16 %v346
        %v425 = vunpack.c.l.b16 %v347
        %v426 = vunpack.c.h.b16 %v347
        %v427 = vunpack.c.l.b16 %v348
        %v428 = vunpack.c.h.b16 %v348
        %v429 = vpack.c.b16 %v399, %v397
        %v430 = vpack.c.b16 %v400, %v398
        %v431 = vpack.c.b16 %v403, %v401
        %v432 = vpack.c.b16 %v404, %v402
        %v433 = vpack.c.b16 %v407, %v405
        %v434 = vpack.c.b16 %v408, %v406
        %v435 = vpack.c.b16 %v411, %v409
        %v436 = vpack.c.b16 %v412, %v410
        %v437 = vpack.c.b16 %v415, %v413
        %v438 = vpack.c.b16 %v416, %v414
        %v439 = vpack.c.b16 %v419, %v417
        %v440 = vpack.c.b16 %v420, %v418
        %v441 = vpack.c.b16 %v423, %v421
        %v442 = vpack.c.b16 %v424, %v422
        %v443 = vpack.c.b16 %v427, %v425
        %v444 = vpack.c.b16 %v428, %v426
        %v478 = vunpack.c.l.b16 %v349
        %v479 = vunpack.c.l.b16 %v350
        %v480 = vunpack.c.l.b16 %v351
        %v481 = vunpack.c.l.b16 %v352
        %v482 = vunpack.c.l.b16 %v353
        %v483 = vunpack.c.l.b16 %v354
        %v484 = vunpack.c.l.b16 %v355
        %v485 = vunpack.c.l.b16 %v356
        %v486 = vunpack.c.l.b16 %v357
        %v487 = vunpack.c.l.b16 %v358
        %v488 = vunpack.c.l.b16 %v359
        %v489 = vunpack.c.l.b16 %v360
        %v490 = vunpack.c.l.b16 %v361
        %v491 = vunpack.c.l.b16 %v362
        %v492 = vunpack.c.l.b16 %v363
        %v493 = vunpack.c.l.b16 %v364
        %v494 = vunpack.c.l.b16 %v365
        %v495 = vunpack.c.l.b16 %v366
        %v496 = vunpack.c.l.b16 %v367
        %v497 = vunpack.c.l.b16 %v368
        %v498 = vunpack.c.l.b16 %v369
        %v499 = vunpack.c.l.b16 %v370
        %v500 = vunpack.c.l.b16 %v371
        %v501 = vunpack.c.l.b16 %v372
        %v502 = vunpack.c.l.b16 %v373
        %v503 = vpack.c.b16 %v479, %v478
        %v504 = vpack.c.b16 %v481, %v480
        %v505 = vpack.c.b16 %v483, %v482
        %v506 = vpack.c.b16 %v485, %v484
        %v507 = vpack.c.b16 %v487, %v486
        %v508 = vpack.c.b16 %v489, %v488
        %v509 = vpack.c.b16 %v491, %v490
        %v510 = vpack.c.b16 %v493, %v492
        %v511 = vpack.c.b16 %v495, %v494
        %v512 = vpack.c.b16 %v497, %v496
        %v513 = vpack.c.b16 %v499, %v498
        %v514 = vpack.c.b16 %v501, %v500
        %v515 = vpack.c.b16 %v502, %v502
        %vm528 = vcmask 588800
        %v530 = vsel %vm528, %v430, 0
        %v533 = vsel %vm528, %v432, 0
        %v536 = vsel %vm528, %v434, 0
        %v539 = vsel %vm528, %v436, 0
        %v542 = vsel %vm528, %v438, 0
        %v545 = vsel %vm528, %v440, 0
        %v548 = vsel %vm528, %v442, 0
        %v551 = vsel %vm528, %v444, 0
        %vm553 = vcmask 1043456
        %v555 = vsel %vm553, %v515, 0
        %557 = vmatprep.subr.bf16.mxu0 0
        %558 = vmatpush1.bf16.msra.mxu0 %v503
        %559 = vmatprep.subr.bf16.mxu0 0
        %560 = vmatpush1.bf16.msra.mxu0 %v504
        %561 = vmatprep.subr.bf16.mxu0 0
        %562 = vmatpush1.bf16.msra.mxu0 %v505
        %563 = vmatprep.subr.bf16.mxu0 0
        %564 = vmatpush1.bf16.msra.mxu0 %v506
        %565 = vmatprep.subr.bf16.mxu0 0
        %566 = vmatpush1.bf16.msra.mxu0 %v507
        %567 = vmatprep.subr.bf16.mxu0 0
        %568 = vmatpush1.bf16.msra.mxu0 %v508
        %569 = vmatprep.subr.bf16.mxu0 0
        %570 = vmatpush1.bf16.msra.mxu0 %v509
        %571 = vmatprep.subr.bf16.mxu0 0
        %572 = vmatpush1.bf16.msra.mxu0 %v510
        %573 = vmatprep.subr.bf16.mxu0 0
        %574 = vmatpush1.bf16.msra.mxu0 %v511
        %575 = vmatprep.subr.bf16.mxu0 0
        %576 = vmatpush1.bf16.msra.mxu0 %v512
        %577 = vmatprep.subr.bf16.mxu0 0
        %578 = vmatpush1.bf16.msra.mxu0 %v513
        %579 = vmatprep.subr.bf16.mxu0 0
        %580 = vmatpush1.bf16.msra.mxu0 %v514
        %581 = vmatprep.subr.bf16.mxu0 0
        %582 = vmatpush1.bf16.msra.mxu0 %v555
        %583 = vmatprep.subr.bf16.mxu0 0
        %584 = vmatpush1.bf16.msra.mxu0 0
        %585 = vmatprep.subr.bf16.mxu0 0
        %586 = vmatpush1.bf16.msra.mxu0 0
        %587 = vmatprep.subr.bf16.mxu0 0
        %588 = vmatpush1.bf16.msra.mxu0 0
        %589 = vmatprep.mubr.bf16.mxu0 %v530
        %590 = vmatmul.mubr.bf16.gmra.mrb[0].mxu0 %v429
        %v591 = vpop.f32.mrb[0].mxu0
        %v592 = vadd.f32 %v379, %v591
        %v593 = vpop.f32.mrb[0].mxu0
        %v594 = vpop.f32.mrb[0].mxu0
        %v595 = vadd.f32 %v379, %v594
        %v596 = vpop.f32.mrb[0].mxu0
        %597 = vmatprep.mubr.bf16.mxu0 %v533
        %598 = vmatmul.mubr.bf16.gmra.mrb[0].mxu0 %v431
        %v599 = vpop.f32.mrb[0].mxu0
        %v600 = vadd.f32 %v379, %v599
        %v601 = vpop.f32.mrb[0].mxu0
        %v602 = vpop.f32.mrb[0].mxu0
        %v603 = vadd.f32 %v379, %v602
        %v604 = vpop.f32.mrb[0].mxu0
        %605 = vmatprep.mubr.bf16.mxu0 %v536
        %606 = vmatmul.mubr.bf16.gmra.mrb[0].mxu0 %v433
        %v607 = vpop.f32.mrb[0].mxu0
        %v608 = vadd.f32 %v379, %v607
        %v609 = vpop.f32.mrb[0].mxu0
        %v610 = vpop.f32.mrb[0].mxu0
        %v611 = vadd.f32 %v379, %v610
        %v612 = vpop.f32.mrb[0].mxu0
        %613 = vmatprep.mubr.bf16.mxu0 %v539
        %614 = vmatmul.mubr.bf16.gmra.mrb[0].mxu0 %v435
        %v615 = vpop.f32.mrb[0].mxu0
        %v616 = vadd.f32 %v379, %v615
        %v617 = vpop.f32.mrb[0].mxu0
        %v618 = vpop.f32.mrb[0].mxu0
        %v619 = vadd.f32 %v379, %v618
        %v620 = vpop.f32.mrb[0].mxu0
        %621 = vmatprep.mubr.bf16.mxu0 %v542
        %622 = vmatmul.mubr.bf16.gmra.mrb[0].mxu0 %v437
        %v623 = vpop.f32.mrb[0].mxu0
        %v624 = vadd.f32 %v379, %v623
        %v625 = vpop.f32.mrb[0].mxu0
        %v626 = vpop.f32.mrb[0].mxu0
        %v627 = vadd.f32 %v379, %v626
        %v628 = vpop.f32.mrb[0].mxu0
        %629 = vmatprep.mubr.bf16.mxu0 %v545
        %630 = vmatmul.mubr.bf16.gmra.mrb[0].mxu0 %v439
        %v631 = vpop.f32.mrb[0].mxu0
        %v632 = vadd.f32 %v379, %v631
        %v633 = vpop.f32.mrb[0].mxu0
        %v634 = vpop.f32.mrb[0].mxu0
        %v635 = vadd.f32 %v379, %v634
        %v636 = vpop.f32.mrb[0].mxu0
        %637 = vmatprep.mubr.bf16.mxu0 %v548
        %638 = vmatmul.mubr.bf16.gmra.mrb[0].mxu0 %v441
        %v639 = vpop.f32.mrb[0].mxu0
        %v640 = vadd.f32 %v379, %v639
        %v641 = vpop.f32.mrb[0].mxu0
        %v642 = vpop.f32.mrb[0].mxu0
        %v643 = vadd.f32 %v379, %v642
        %v644 = vpop.f32.mrb[0].mxu0
        %645 = vmatprep.mubr.bf16.mxu0 %v551
        %646 = vmatmul.mubr.bf16.gmra.mrb[0].mxu0 %v443
        %v647 = vpop.f32.mrb[0].mxu0
        %v648 = vadd.f32 %v379, %v647
        %v649 = vpop.f32.mrb[0].mxu0
        %v650 = vpop.f32.mrb[0].mxu0
        %v651 = vadd.f32 %v379, %v650
        %v652 = vpop.f32.mrb[0].mxu0
        %653 = vdwg.mxu0
        %v654 = vmax.f32 %v592, 0.0
        %v655 = vmax.f32 %v595, 0.0
        %v656 = vmax.f32 %v600, 0.0
        %v657 = vmax.f32 %v603, 0.0
        %v658 = vmax.f32 %v608, 0.0
        %v659 = vmax.f32 %v611, 0.0
        %v660 = vmax.f32 %v616, 0.0
        %v661 = vmax.f32 %v619, 0.0
        %v662 = vmax.f32 %v624, 0.0
        %v663 = vmax.f32 %v627, 0.0
        %v664 = vmax.f32 %v632, 0.0
        %v665 = vmax.f32 %v635, 0.0
        %v666 = vmax.f32 %v640, 0.0
        %v667 = vmax.f32 %v643, 0.0
        %v668 = vmax.f32 %v648, 0.0
        %v669 = vmax.f32 %v651, 0.0
        %v670 = vld [vmem:[%s329] sm:$0xf]
        %v671 = vld [vmem:[%s329 + $0x4] sm:$0xf]
        %v672 = vld [vmem:[%s329 + $0x8] sm:$0xf]
        %v673 = vld [vmem:[%s329 + $0xc] sm:$0xf]
        %v674 = vld [vmem:[%s329 + $0x10] sm:$0xf]
        %v675 = vld [vmem:[%s329 + $0x14] sm:$0xf]
        %v676 = vld [vmem:[%s329 + $0x18] sm:$0xf]
        %v677 = vld [vmem:[%s329 + $0x1c] sm:$0xf]
        %v678 = vld [vmem:[%s329 + $0x20] sm:$0xf]
        %v679 = vld [vmem:[%s329 + $0x24] sm:$0xf]
        %v680 = vld [vmem:[%s329 + $0x28] sm:$0xf]
        %v681 = vld [vmem:[%s329 + $0x2c] sm:$0xf]
        %v682 = vld [vmem:[%s329 + $0x30] sm:$0xf]
        %v683 = vld [vmem:[%s329 + $0x34] sm:$0xf]
        %v684 = vld [vmem:[%s329 + $0x38] sm:$0xf]
        %v685 = vld [vmem:[%s329 + $0x3c] sm:$0xf]
        %v686 = vld [vmem:[%s4] sm:$0xf]
        %v687 = vld [vmem:[%s4 + $0x4] sm:$0xf]
        %v688 = vld [vmem:[%s5] sm:$0x1]
        %v690 = vlaneseq
        %v691 = vshrl.u32 %v690, 7
        %v692 = vsub.s32 0, %v691
        %v693 = vrot.slane %v688, %v692
        %v711 = vunpack.c.l.b16 %v670
        %v712 = vunpack.c.l.b16 %v671
        %v713 = vunpack.c.l.b16 %v672
        %v714 = vunpack.c.l.b16 %v673
        %v715 = vunpack.c.l.b16 %v674
        %v716 = vunpack.c.l.b16 %v675
        %v717 = vunpack.c.l.b16 %v676
        %v718 = vunpack.c.l.b16 %v677
        %v719 = vunpack.c.l.b16 %v678
        %v720 = vunpack.c.l.b16 %v679
        %v721 = vunpack.c.l.b16 %v680
        %v722 = vunpack.c.l.b16 %v681
        %v723 = vunpack.c.l.b16 %v682
        %v724 = vunpack.c.l.b16 %v683
        %v725 = vunpack.c.l.b16 %v684
        %v726 = vunpack.c.l.b16 %v685
        %v727 = vpack.c.b16 %v712, %v711
        %v728 = vpack.c.b16 %v714, %v713
        %v729 = vpack.c.b16 %v716, %v715
        %v730 = vpack.c.b16 %v718, %v717
        %v731 = vpack.c.b16 %v720, %v719
        %v732 = vpack.c.b16 %v722, %v721
        %v733 = vpack.c.b16 %v724, %v723
        %v734 = vpack.c.b16 %v726, %v725
        %v737 = vunpack.c.l.b16 %v686
        %v738 = vunpack.c.l.b16 %v687
        %v739 = vpack.c.b16 %v738, %v737
        %vm741 = vcmask 130048
        %v743 = vsel %vm741, %v727, 0
        %v746 = vsel %vm741, %v728, 0
        %v749 = vsel %vm741, %v729, 0
        %v752 = vsel %vm741, %v730, 0
        %v755 = vsel %vm741, %v731, 0
        %v758 = vsel %vm741, %v732, 0
        %v761 = vsel %vm741, %v733, 0
        %v764 = vsel %vm741, %v734, 0
        %766 = vmatprep.subr.bf16.mxu0 0
        %767 = vmatpush1.bf16.msra.mxu0 %v739
        %768 = vmatprep.subr.bf16.mxu0 0
        %769 = vmatpush1.bf16.msra.mxu0 0
        %770 = vmatprep.subr.bf16.mxu0 0
        %771 = vmatpush1.bf16.msra.mxu0 0
        %772 = vmatprep.subr.bf16.mxu0 0
        %773 = vmatpush1.bf16.msra.mxu0 0
        %774 = vmatprep.subr.bf16.mxu0 0
        %775 = vmatpush1.bf16.msra.mxu0 0
        %776 = vmatprep.subr.bf16.mxu0 0
        %777 = vmatpush1.bf16.msra.mxu0 0
        %778 = vmatprep.subr.bf16.mxu0 0
        %779 = vmatpush1.bf16.msra.mxu0 0
        %780 = vmatprep.subr.bf16.mxu0 0
        %781 = vmatpush1.bf16.msra.mxu0 0
        %782 = vmatprep.subr.bf16.mxu0 0
        %783 = vmatpush1.bf16.msra.mxu0 0
        %784 = vmatprep.subr.bf16.mxu0 0
        %785 = vmatpush1.bf16.msra.mxu0 0
        %786 = vmatprep.subr.bf16.mxu0 0
        %787 = vmatpush1.bf16.msra.mxu0 0
        %788 = vmatprep.subr.bf16.mxu0 0
        %789 = vmatpush1.bf16.msra.mxu0 0
        %790 = vmatprep.subr.bf16.mxu0 0
        %791 = vmatpush1.bf16.msra.mxu0 0
        %792 = vmatprep.subr.bf16.mxu0 0
        %793 = vmatpush1.bf16.msra.mxu0 0
        %794 = vmatprep.subr.bf16.mxu0 0
        %795 = vmatpush1.bf16.msra.mxu0 0
        %796 = vmatprep.subr.bf16.mxu0 0
        %797 = vmatpush1.bf16.msra.mxu0 0
        %798 = vmatprep.mubr.bf16.mxu0 0
        %799 = vmatmul.mubr.bf16.gmra.mrb[0].mxu0 %v743
        %v800 = vpop.f32.mrb[0].mxu0
        %v801 = vadd.f32 %v693, %v800
        %v802 = vpop.f32.mrb[0].mxu0
        %v803 = vpop.f32.mrb[0].mxu0
        %v804 = vadd.f32 %v693, %v803
        %v805 = vpop.f32.mrb[0].mxu0
        %806 = vmatprep.mubr.bf16.mxu0 0
        %807 = vmatmul.mubr.bf16.gmra.mrb[0].mxu0 %v746
        %v808 = vpop.f32.mrb[0].mxu0
        %v809 = vadd.f32 %v693, %v808
        %v810 = vpop.f32.mrb[0].mxu0
        %v811 = vpop.f32.mrb[0].mxu0
        %v812 = vadd.f32 %v693, %v811
        %v813 = vpop.f32.mrb[0].mxu0
        %814 = vmatprep.mubr.bf16.mxu0 0
        %815 = vmatmul.mubr.bf16.gmra.mrb[0].mxu0 %v749
        %v816 = vpop.f32.mrb[0].mxu0
        %v817 = vadd.f32 %v693, %v816
        %v818 = vpop.f32.mrb[0].mxu0
        %v819 = vpop.f32.mrb[0].mxu0
        %v820 = vadd.f32 %v693, %v819
        %v821 = vpop.f32.mrb[0].mxu0
        %822 = vmatprep.mubr.bf16.mxu0 0
        %823 = vmatmul.mubr.bf16.gmra.mrb[0].mxu0 %v752
        %v824 = vpop.f32.mrb[0].mxu0
        %v825 = vadd.f32 %v693, %v824
        %v826 = vpop.f32.mrb[0].mxu0
        %v827 = vpop.f32.mrb[0].mxu0
        %v828 = vadd.f32 %v693, %v827
        %v829 = vpop.f32.mrb[0].mxu0
        %830 = vmatprep.mubr.bf16.mxu0 0
        %831 = vmatmul.mubr.bf16.gmra.mrb[0].mxu0 %v755
        %v832 = vpop.f32.mrb[0].mxu0
        %v833 = vadd.f32 %v693, %v832
        %v834 = vpop.f32.mrb[0].mxu0
        %v835 = vpop.f32.mrb[0].mxu0
        %v836 = vadd.f32 %v693, %v835
        %v837 = vpop.f32.mrb[0].mxu0
        %838 = vmatprep.mubr.bf16.mxu0 0
        %839 = vmatmul.mubr.bf16.gmra.mrb[0].mxu0 %v758
        %v840 = vpop.f32.mrb[0].mxu0
        %v841 = vadd.f32 %v693, %v840
        %v842 = vpop.f32.mrb[0].mxu0
        %v843 = vpop.f32.mrb[0].mxu0
        %v844 = vadd.f32 %v693, %v843
        %v845 = vpop.f32.mrb[0].mxu0
        %846 = vmatprep.mubr.bf16.mxu0 0
        %847 = vmatmul.mubr.bf16.gmra.mrb[0].mxu0 %v761
        %v848 = vpop.f32.mrb[0].mxu0
        %v849 = vadd.f32 %v693, %v848
        %v850 = vpop.f32.mrb[0].mxu0
        %v851 = vpop.f32.mrb[0].mxu0
        %v852 = vadd.f32 %v693, %v851
        %v853 = vpop.f32.mrb[0].mxu0
        %854 = vmatprep.mubr.bf16.mxu0 0
        %855 = vmatmul.mubr.bf16.gmra.mrb[0].mxu0 %v764
        %v856 = vpop.f32.mrb[0].mxu0
        %v857 = vadd.f32 %v693, %v856
        %v858 = vpop.f32.mrb[0].mxu0
        %v859 = vpop.f32.mrb[0].mxu0
        %v860 = vadd.f32 %v693, %v859
        %v861 = vpop.f32.mrb[0].mxu0
        %862 = vdwg.mxu0
        %v863 = vmax.f32 %v801, 0.0
        %v864 = vmax.f32 %v804, 0.0
        %v865 = vmax.f32 %v809, 0.0
        %v866 = vmax.f32 %v812, 0.0
        %v867 = vmax.f32 %v817, 0.0
        %v868 = vmax.f32 %v820, 0.0
        %v869 = vmax.f32 %v825, 0.0
        %v870 = vmax.f32 %v828, 0.0
        %v871 = vmax.f32 %v833, 0.0
        %v872 = vmax.f32 %v836, 0.0
        %v873 = vmax.f32 %v841, 0.0
        %v874 = vmax.f32 %v844, 0.0
        %v875 = vmax.f32 %v849, 0.0
        %v876 = vmax.f32 %v852, 0.0
        %v877 = vmax.f32 %v857, 0.0
        %v878 = vmax.f32 %v860, 0.0
        %v879 = vpack.c.bf16 %v655, %v654
        %v880 = vpack.c.bf16 %v657, %v656
        %v881 = vpack.c.bf16 %v659, %v658
        %v882 = vpack.c.bf16 %v661, %v660
        %v883 = vpack.c.bf16 %v663, %v662
        %v884 = vpack.c.bf16 %v665, %v664
        %v885 = vpack.c.bf16 %v667, %v666
        %v886 = vpack.c.bf16 %v669, %v668
        %v887 = vpack.c.bf16 %v864, %v863
        %v888 = vpack.c.bf16 %v866, %v865
        %v889 = vpack.c.bf16 %v868, %v867
        %v890 = vpack.c.bf16 %v870, %v869
        %v891 = vpack.c.bf16 %v872, %v871
        %v892 = vpack.c.bf16 %v874, %v873
        %v893 = vpack.c.bf16 %v876, %v875
        %v894 = vpack.c.bf16 %v878, %v877
        %903 = vrot.lane.b32.xlu0 %v887, 32
        %v904 = vpop.permute.xlu0 %903
        %905 = vrot.lane.b32.xlu0 %v888, 32
        %v906 = vpop.permute.xlu0 %905
        %907 = vrot.lane.b32.xlu0 %v889, 32
        %v908 = vpop.permute.xlu0 %907
        %909 = vrot.lane.b32.xlu0 %v890, 32
        %v910 = vpop.permute.xlu0 %909
        %911 = vrot.lane.b32.xlu0 %v891, 32
        %v912 = vpop.permute.xlu0 %911
        %913 = vrot.lane.b32.xlu0 %v892, 32
        %v914 = vpop.permute.xlu0 %913
        %915 = vrot.lane.b32.xlu0 %v893, 32
        %v916 = vpop.permute.xlu0 %915
        %917 = vrot.lane.b32.xlu0 %v894, 32
        %v918 = vpop.permute.xlu0 %917
        %vm919 = vcmask 261120
        %v922 = vsel %vm919, %v879, %v904
        %v925 = vsel %vm919, %v880, %v906
        %v928 = vsel %vm919, %v881, %v908
        %v931 = vsel %vm919, %v882, %v910
        %v934 = vsel %vm919, %v883, %v912
        %v937 = vsel %vm919, %v884, %v914
        %v940 = vsel %vm919, %v885, %v916
        %v943 = vsel %vm919, %v886, %v918
        %v944 = vld [vmem:[%s6] sm:$0xf]
        %v945 = vld [vmem:[%s6 + $0x4] sm:$0xf]
        %v946 = vld [vmem:[%s6 + $0x8] sm:$0xf]
        %v947 = vld [vmem:[%s6 + $0xc] sm:$0xf]
        %v948 = vld [vmem:[%s6 + $0x10] sm:$0xf]
        %v949 = vld [vmem:[%s6 + $0x14] sm:$0xf]
        %v950 = vld [vmem:[%s6 + $0x18] sm:$0xf]
        %v951 = vld [vmem:[%s6 + $0x1c] sm:$0xf]
        %v952 = vld [vmem:[%s7] sm:$0x1]
        %v954 = vlaneseq
        %v955 = vshrl.u32 %v954, 7
        %v956 = vsub.s32 0, %v955
        %v957 = vrot.slane %v952, %v956
        %v967 = vunpack.c.l.b16 %v944
        %v968 = vunpack.c.l.b16 %v945
        %v969 = vunpack.c.l.b16 %v946
        %v970 = vunpack.c.l.b16 %v947
        %v971 = vunpack.c.l.b16 %v948
        %v972 = vunpack.c.l.b16 %v949
        %v973 = vunpack.c.l.b16 %v950
        %v974 = vunpack.c.l.b16 %v951
        %v975 = vpack.c.b16 %v968, %v967
        %v976 = vpack.c.b16 %v970, %v969
        %v977 = vpack.c.b16 %v972, %v971
        %v978 = vpack.c.b16 %v974, %v973
        %vm983 = vcmask 523264
        %v984 = vsel %vm983, %v922, 0
        %v986 = vsel %vm983, %v925, 0
        %v988 = vsel %vm983, %v928, 0
        %v990 = vsel %vm983, %v931, 0
        %v992 = vsel %vm983, %v934, 0
        %v994 = vsel %vm983, %v937, 0
        %v996 = vsel %vm983, %v940, 0
        %v998 = vsel %vm983, %v943, 0
        %1000 = vmatprep.subr.bf16.mxu0 0
        %1001 = vmatpush1.bf16.msra.mxu0 %v975
        %1002 = vmatprep.subr.bf16.mxu0 0
        %1003 = vmatpush1.bf16.msra.mxu0 %v976
        %1004 = vmatprep.subr.bf16.mxu0 0
        %1005 = vmatpush1.bf16.msra.mxu0 %v977
        %1006 = vmatprep.subr.bf16.mxu0 0
        %1007 = vmatpush1.bf16.msra.mxu0 %v978
        %1008 = vmatprep.subr.bf16.mxu0 0
        %1009 = vmatpush1.bf16.msra.mxu0 0
        %1010 = vmatprep.subr.bf16.mxu0 0
        %1011 = vmatpush1.bf16.msra.mxu0 0
        %1012 = vmatprep.subr.bf16.mxu0 0
        %1013 = vmatpush1.bf16.msra.mxu0 0
        %1014 = vmatprep.subr.bf16.mxu0 0
        %1015 = vmatpush1.bf16.msra.mxu0 0
        %1016 = vmatprep.subr.bf16.mxu0 0
        %1017 = vmatpush1.bf16.msra.mxu0 0
        %1018 = vmatprep.subr.bf16.mxu0 0
        %1019 = vmatpush1.bf16.msra.mxu0 0
        %1020 = vmatprep.subr.bf16.mxu0 0
        %1021 = vmatpush1.bf16.msra.mxu0 0
        %1022 = vmatprep.subr.bf16.mxu0 0
        %1023 = vmatpush1.bf16.msra.mxu0 0
        %1024 = vmatprep.subr.bf16.mxu0 0
        %1025 = vmatpush1.bf16.msra.mxu0 0
        %1026 = vmatprep.subr.bf16.mxu0 0
        %1027 = vmatpush1.bf16.msra.mxu0 0
        %1028 = vmatprep.subr.bf16.mxu0 0
        %1029 = vmatpush1.bf16.msra.mxu0 0
        %1030 = vmatprep.subr.bf16.mxu0 0
        %1031 = vmatpush1.bf16.msra.mxu0 0
        %1032 = vmatprep.mubr.bf16.mxu0 0
        %1033 = vmatmul.mubr.bf16.gmra.mrb[0].mxu0 %v984
        %v1034 = vpop.f32.mrb[0].mxu0
        %v1035 = vadd.f32 %v957, %v1034
        %v1036 = vpop.f32.mrb[0].mxu0
        %v1037 = vpop.f32.mrb[0].mxu0
        %v1038 = vadd.f32 %v957, %v1037
        %v1039 = vpop.f32.mrb[0].mxu0
        %1040 = vmatprep.mubr.bf16.mxu0 0
        %1041 = vmatmul.mubr.bf16.gmra.mrb[0].mxu0 %v986
        %v1042 = vpop.f32.mrb[0].mxu0
        %v1043 = vadd.f32 %v957, %v1042
        %v1044 = vpop.f32.mrb[0].mxu0
        %v1045 = vpop.f32.mrb[0].mxu0
        %v1046 = vadd.f32 %v957, %v1045
        %v1047 = vpop.f32.mrb[0].mxu0
        %1048 = vmatprep.mubr.bf16.mxu0 0
        %1049 = vmatmul.mubr.bf16.gmra.mrb[0].mxu0 %v988
        %v1050 = vpop.f32.mrb[0].mxu0
        %v1051 = vadd.f32 %v957, %v1050
        %v1052 = vpop.f32.mrb[0].mxu0
        %v1053 = vpop.f32.mrb[0].mxu0
        %v1054 = vadd.f32 %v957, %v1053
        %v1055 = vpop.f32.mrb[0].mxu0
        %1056 = vmatprep.mubr.bf16.mxu0 0
        %1057 = vmatmul.mubr.bf16.gmra.mrb[0].mxu0 %v990
        %v1058 = vpop.f32.mrb[0].mxu0
        %v1059 = vadd.f32 %v957, %v1058
        %v1060 = vpop.f32.mrb[0].mxu0
        %v1061 = vpop.f32.mrb[0].mxu0
        %v1062 = vadd.f32 %v957, %v1061
        %v1063 = vpop.f32.mrb[0].mxu0
        %1064 = vmatprep.mubr.bf16.mxu0 0
        %1065 = vmatmul.mubr.bf16.gmra.mrb[0].mxu0 %v992
        %v1066 = vpop.f32.mrb[0].mxu0
        %v1067 = vadd.f32 %v957, %v1066
        %v1068 = vpop.f32.mrb[0].mxu0
        %v1069 = vpop.f32.mrb[0].mxu0
        %v1070 = vadd.f32 %v957, %v1069
        %v1071 = vpop.f32.mrb[0].mxu0
        %1072 = vmatprep.mubr.bf16.mxu0 0
        %1073 = vmatmul.mubr.bf16.gmra.mrb[0].mxu0 %v994
        %v1074 = vpop.f32.mrb[0].mxu0
        %v1075 = vadd.f32 %v957, %v1074
        %v1076 = vpop.f32.mrb[0].mxu0
        %v1077 = vpop.f32.mrb[0].mxu0
        %v1078 = vadd.f32 %v957, %v1077
        %v1079 = vpop.f32.mrb[0].mxu0
        %1080 = vmatprep.mubr.bf16.mxu0 0
        %1081 = vmatmul.mubr.bf16.gmra.mrb[0].mxu0 %v996
        %v1082 = vpop.f32.mrb[0].mxu0
        %v1083 = vadd.f32 %v957, %v1082
        %v1084 = vpop.f32.mrb[0].mxu0
        %v1085 = vpop.f32.mrb[0].mxu0
        %v1086 = vadd.f32 %v957, %v1085
        %v1087 = vpop.f32.mrb[0].mxu0
        %1088 = vmatprep.mubr.bf16.mxu0 0
        %1089 = vmatmul.mubr.bf16.gmra.mrb[0].mxu0 %v998
        %v1090 = vpop.f32.mrb[0].mxu0
        %v1091 = vadd.f32 %v957, %v1090
        %v1092 = vpop.f32.mrb[0].mxu0
        %v1093 = vpop.f32.mrb[0].mxu0
        %v1094 = vadd.f32 %v957, %v1093
        %v1095 = vpop.f32.mrb[0].mxu0
        %1096 = vdwg.mxu0
        %v1097 = vxor.u32 %v1035, 2147483648
        %v1098 = vxor.u32 %v1038, 2147483648
        %v1099 = vxor.u32 %v1043, 2147483648
        %v1100 = vxor.u32 %v1046, 2147483648
        %v1101 = vxor.u32 %v1051, 2147483648
        %v1102 = vxor.u32 %v1054, 2147483648
        %v1103 = vxor.u32 %v1059, 2147483648
        %v1104 = vxor.u32 %v1062, 2147483648
        %v1105 = vxor.u32 %v1067, 2147483648
        %v1106 = vxor.u32 %v1070, 2147483648
        %v1107 = vxor.u32 %v1075, 2147483648
        %v1108 = vxor.u32 %v1078, 2147483648
        %v1109 = vxor.u32 %v1083, 2147483648
        %v1110 = vxor.u32 %v1086, 2147483648
        %v1111 = vxor.u32 %v1091, 2147483648
        %v1112 = vxor.u32 %v1094, 2147483648
        %v1113 = vmul.f32 %v1097, 1.442695
        %v1114 = vpow.pop %v1113
        %v1115 = vmul.f32 %v1098, 1.442695
        %v1116 = vpow.pop %v1115
        %v1117 = vmul.f32 %v1099, 1.442695
        %v1118 = vpow.pop %v1117
        %v1119 = vmul.f32 %v1100, 1.442695
        %v1120 = vpow.pop %v1119
        %v1121 = vmul.f32 %v1101, 1.442695
        %v1122 = vpow.pop %v1121
        %v1123 = vmul.f32 %v1102, 1.442695
        %v1124 = vpow.pop %v1123
        %v1125 = vmul.f32 %v1103, 1.442695
        %v1126 = vpow.pop %v1125
        %v1127 = vmul.f32 %v1104, 1.442695
        %v1128 = vpow.pop %v1127
        %v1129 = vmul.f32 %v1105, 1.442695
        %v1130 = vpow.pop %v1129
        %v1131 = vmul.f32 %v1106, 1.442695
        %v1132 = vpow.pop %v1131
        %v1133 = vmul.f32 %v1107, 1.442695
        %v1134 = vpow.pop %v1133
        %v1135 = vmul.f32 %v1108, 1.442695
        %v1136 = vpow.pop %v1135
        %v1137 = vmul.f32 %v1109, 1.442695
        %v1138 = vpow.pop %v1137
        %v1139 = vmul.f32 %v1110, 1.442695
        %v1140 = vpow.pop %v1139
        %v1141 = vmul.f32 %v1111, 1.442695
        %v1142 = vpow.pop %v1141
        %v1143 = vmul.f32 %v1112, 1.442695
        %v1144 = vpow.pop %v1143
        %v1145 = vadd.f32 %v1114, 1.0
        %v1146 = vadd.f32 %v1116, 1.0
        %v1147 = vadd.f32 %v1118, 1.0
        %v1148 = vadd.f32 %v1120, 1.0
        %v1149 = vadd.f32 %v1122, 1.0
        %v1150 = vadd.f32 %v1124, 1.0
        %v1151 = vadd.f32 %v1126, 1.0
        %v1152 = vadd.f32 %v1128, 1.0
        %v1153 = vadd.f32 %v1130, 1.0
        %v1154 = vadd.f32 %v1132, 1.0
        %v1155 = vadd.f32 %v1134, 1.0
        %v1156 = vadd.f32 %v1136, 1.0
        %v1157 = vadd.f32 %v1138, 1.0
        %v1158 = vadd.f32 %v1140, 1.0
        %v1159 = vadd.f32 %v1142, 1.0
        %v1160 = vadd.f32 %v1144, 1.0
        %v1161 = vrcp.pop %v1145
        %v1162 = vmul.f32 1.0, %v1161
        %v1163 = vrcp.pop %v1146
        %v1164 = vmul.f32 1.0, %v1163
        %v1165 = vrcp.pop %v1147
        %v1166 = vmul.f32 1.0, %v1165
        %v1167 = vrcp.pop %v1148
        %v1168 = vmul.f32 1.0, %v1167
        %v1169 = vrcp.pop %v1149
        %v1170 = vmul.f32 1.0, %v1169
        %v1171 = vrcp.pop %v1150
        %v1172 = vmul.f32 1.0, %v1171
        %v1173 = vrcp.pop %v1151
        %v1174 = vmul.f32 1.0, %v1173
        %v1175 = vrcp.pop %v1152
        %v1176 = vmul.f32 1.0, %v1175
        %v1177 = vrcp.pop %v1153
        %v1178 = vmul.f32 1.0, %v1177
        %v1179 = vrcp.pop %v1154
        %v1180 = vmul.f32 1.0, %v1179
        %v1181 = vrcp.pop %v1155
        %v1182 = vmul.f32 1.0, %v1181
        %v1183 = vrcp.pop %v1156
        %v1184 = vmul.f32 1.0, %v1183
        %v1185 = vrcp.pop %v1157
        %v1186 = vmul.f32 1.0, %v1185
        %v1187 = vrcp.pop %v1158
        %v1188 = vmul.f32 1.0, %v1187
        %v1189 = vrcp.pop %v1159
        %v1190 = vmul.f32 1.0, %v1189
        %v1191 = vrcp.pop %v1160
        %v1192 = vmul.f32 1.0, %v1191
        %1194 = vset.pattern.permute.xlu0 8
        %1195 = vperm.xlu0 %1194, %v1162
        %v1196 = vpop.permute.xlu0 %1195
        %1199 = vset.pattern.permute.xlu0 8
        %1200 = vperm.xlu0 %1199, %v1164
        %v1201 = vpop.permute.xlu0 %1200
        %1204 = vset.pattern.permute.xlu0 8
        %1205 = vperm.xlu0 %1204, %v1166
        %v1206 = vpop.permute.xlu0 %1205
        %1209 = vset.pattern.permute.xlu0 8
        %1210 = vperm.xlu0 %1209, %v1168
        %v1211 = vpop.permute.xlu0 %1210
        %1214 = vset.pattern.permute.xlu0 8
        %1215 = vperm.xlu0 %1214, %v1170
        %v1216 = vpop.permute.xlu0 %1215
        %1219 = vset.pattern.permute.xlu0 8
        %1220 = vperm.xlu0 %1219, %v1172
        %v1221 = vpop.permute.xlu0 %1220
        %1224 = vset.pattern.permute.xlu0 8
        %1225 = vperm.xlu0 %1224, %v1174
        %v1226 = vpop.permute.xlu0 %1225
        %1229 = vset.pattern.permute.xlu0 8
        %1230 = vperm.xlu0 %1229, %v1176
        %v1231 = vpop.permute.xlu0 %1230
        %1234 = vset.pattern.permute.xlu0 8
        %1235 = vperm.xlu0 %1234, %v1178
        %v1236 = vpop.permute.xlu0 %1235
        %1239 = vset.pattern.permute.xlu0 8
        %1240 = vperm.xlu0 %1239, %v1180
        %v1241 = vpop.permute.xlu0 %1240
        %1244 = vset.pattern.permute.xlu0 8
        %1245 = vperm.xlu0 %1244, %v1182
        %v1246 = vpop.permute.xlu0 %1245
        %1249 = vset.pattern.permute.xlu0 8
        %1250 = vperm.xlu0 %1249, %v1184
        %v1251 = vpop.permute.xlu0 %1250
        %1254 = vset.pattern.permute.xlu0 8
        %1255 = vperm.xlu0 %1254, %v1186
        %v1256 = vpop.permute.xlu0 %1255
        %1259 = vset.pattern.permute.xlu0 8
        %1260 = vperm.xlu0 %1259, %v1188
        %v1261 = vpop.permute.xlu0 %1260
        %1264 = vset.pattern.permute.xlu0 8
        %1265 = vperm.xlu0 %1264, %v1190
        %v1266 = vpop.permute.xlu0 %1265
        %1269 = vset.pattern.permute.xlu0 8
        %1270 = vperm.xlu0 %1269, %v1192
        %v1271 = vpop.permute.xlu0 %1270
        %v1273 = vmul.f32 %v1035, %v1196
        %v1274 = vmul.f32 %v1038, %v1201
        %v1275 = vmul.f32 %v1043, %v1206
        %v1276 = vmul.f32 %v1046, %v1211
        %v1277 = vmul.f32 %v1051, %v1216
        %v1278 = vmul.f32 %v1054, %v1221
        %v1279 = vmul.f32 %v1059, %v1226
        %v1280 = vmul.f32 %v1062, %v1231
        %v1281 = vmul.f32 %v1067, %v1236
        %v1282 = vmul.f32 %v1070, %v1241
        %v1283 = vmul.f32 %v1075, %v1246
        %v1284 = vmul.f32 %v1078, %v1251
        %v1285 = vmul.f32 %v1083, %v1256
        %v1286 = vmul.f32 %v1086, %v1261
        %v1287 = vmul.f32 %v1091, %v1266
        %v1288 = vmul.f32 %v1094, %v1271
        %v1289 = vsub.f32 1.0, %v1162
        %v1290 = vsub.f32 1.0, %v1164
        %v1291 = vsub.f32 1.0, %v1166
        %v1292 = vsub.f32 1.0, %v1168
        %v1293 = vsub.f32 1.0, %v1170
        %v1294 = vsub.f32 1.0, %v1172
        %v1295 = vsub.f32 1.0, %v1174
        %v1296 = vsub.f32 1.0, %v1176
        %v1297 = vsub.f32 1.0, %v1178
        %v1298 = vsub.f32 1.0, %v1180
        %v1299 = vsub.f32 1.0, %v1182
        %v1300 = vsub.f32 1.0, %v1184
        %v1301 = vsub.f32 1.0, %v1186
        %v1302 = vsub.f32 1.0, %v1188
        %v1303 = vsub.f32 1.0, %v1190
        %v1304 = vsub.f32 1.0, %v1192
        %1306 = vset.pattern.permute.xlu0 8
        %1307 = vperm.xlu0 %1306, %v1289
        %v1308 = vpop.permute.xlu0 %1307
        %1311 = vset.pattern.permute.xlu0 8
        %1312 = vperm.xlu0 %1311, %v1290
        %v1313 = vpop.permute.xlu0 %1312
        %1316 = vset.pattern.permute.xlu0 8
        %1317 = vperm.xlu0 %1316, %v1291
        %v1318 = vpop.permute.xlu0 %1317
        %1321 = vset.pattern.permute.xlu0 8
        %1322 = vperm.xlu0 %1321, %v1292
        %v1323 = vpop.permute.xlu0 %1322
        %1326 = vset.pattern.permute.xlu0 8
        %1327 = vperm.xlu0 %1326, %v1293
        %v1328 = vpop.permute.xlu0 %1327
        %1331 = vset.pattern.permute.xlu0 8
        %1332 = vperm.xlu0 %1331, %v1294
        %v1333 = vpop.permute.xlu0 %1332
        %1336 = vset.pattern.permute.xlu0 8
        %1337 = vperm.xlu0 %1336, %v1295
        %v1338 = vpop.permute.xlu0 %1337
        %1341 = vset.pattern.permute.xlu0 8
        %1342 = vperm.xlu0 %1341, %v1296
        %v1343 = vpop.permute.xlu0 %1342
        %1346 = vset.pattern.permute.xlu0 8
        %1347 = vperm.xlu0 %1346, %v1297
        %v1348 = vpop.permute.xlu0 %1347
        %1351 = vset.pattern.permute.xlu0 8
        %1352 = vperm.xlu0 %1351, %v1298
        %v1353 = vpop.permute.xlu0 %1352
        %1356 = vset.pattern.permute.xlu0 8
        %1357 = vperm.xlu0 %1356, %v1299
        %v1358 = vpop.permute.xlu0 %1357
        %1361 = vset.pattern.permute.xlu0 8
        %1362 = vperm.xlu0 %1361, %v1300
        %v1363 = vpop.permute.xlu0 %1362
        %1366 = vset.pattern.permute.xlu0 8
        %1367 = vperm.xlu0 %1366, %v1301
        %v1368 = vpop.permute.xlu0 %1367
        %1371 = vset.pattern.permute.xlu0 8
        %1372 = vperm.xlu0 %1371, %v1302
        %v1373 = vpop.permute.xlu0 %1372
        %1376 = vset.pattern.permute.xlu0 8
        %1377 = vperm.xlu0 %1376, %v1303
        %v1378 = vpop.permute.xlu0 %1377
        %1381 = vset.pattern.permute.xlu0 8
        %1382 = vperm.xlu0 %1381, %v1304
        %v1383 = vpop.permute.xlu0 %1382
        %v1385 = vmul.f32 %v1035, %v1308
        %v1386 = vmul.f32 %v1038, %v1313
        %v1387 = vmul.f32 %v1043, %v1318
        %v1388 = vmul.f32 %v1046, %v1323
        %v1389 = vmul.f32 %v1051, %v1328
        %v1390 = vmul.f32 %v1054, %v1333
        %v1391 = vmul.f32 %v1059, %v1338
        %v1392 = vmul.f32 %v1062, %v1343
        %v1393 = vmul.f32 %v1067, %v1348
        %v1394 = vmul.f32 %v1070, %v1353
        %v1395 = vmul.f32 %v1075, %v1358
        %v1396 = vmul.f32 %v1078, %v1363
        %v1397 = vmul.f32 %v1083, %v1368
        %v1398 = vmul.f32 %v1086, %v1373
        %v1399 = vmul.f32 %v1091, %v1378
        %v1400 = vmul.f32 %v1094, %v1383
        %1417 = vrot.lane.b32.xlu0 %v1385, 124
        %v1418 = vpop.permute.xlu0 %1417
        %1419 = vrot.lane.b32.xlu0 %v1386, 124
        %v1420 = vpop.permute.xlu0 %1419
        %1421 = vrot.lane.b32.xlu0 %v1387, 124
        %v1422 = vpop.permute.xlu0 %1421
        %1423 = vrot.lane.b32.xlu0 %v1388, 124
        %v1424 = vpop.permute.xlu0 %1423
        %1425 = vrot.lane.b32.xlu0 %v1389, 124
        %v1426 = vpop.permute.xlu0 %1425
        %1427 = vrot.lane.b32.xlu0 %v1390, 124
        %v1428 = vpop.permute.xlu0 %1427
        %1429 = vrot.lane.b32.xlu0 %v1391, 124
        %v1430 = vpop.permute.xlu0 %1429
        %1431 = vrot.lane.b32.xlu0 %v1392, 124
        %v1432 = vpop.permute.xlu0 %1431
        %1433 = vrot.lane.b32.xlu0 %v1393, 124
        %v1434 = vpop.permute.xlu0 %1433
        %1435 = vrot.lane.b32.xlu0 %v1394, 124
        %v1436 = vpop.permute.xlu0 %1435
        %1437 = vrot.lane.b32.xlu0 %v1395, 124
        %v1438 = vpop.permute.xlu0 %1437
        %1439 = vrot.lane.b32.xlu0 %v1396, 124
        %v1440 = vpop.permute.xlu0 %1439
        %1441 = vrot.lane.b32.xlu0 %v1397, 124
        %v1442 = vpop.permute.xlu0 %1441
        %1443 = vrot.lane.b32.xlu0 %v1398, 124
        %v1444 = vpop.permute.xlu0 %1443
        %1445 = vrot.lane.b32.xlu0 %v1399, 124
        %v1446 = vpop.permute.xlu0 %1445
        %1447 = vrot.lane.b32.xlu0 %v1400, 124
        %v1448 = vpop.permute.xlu0 %1447
        %v1465 = vadd.f32 %v1273, %v1418
        %v1466 = vadd.f32 %v1274, %v1420
        %v1467 = vadd.f32 %v1275, %v1422
        %v1468 = vadd.f32 %v1276, %v1424
        %v1469 = vadd.f32 %v1277, %v1426
        %v1470 = vadd.f32 %v1278, %v1428
        %v1471 = vadd.f32 %v1279, %v1430
        %v1472 = vadd.f32 %v1280, %v1432
        %v1473 = vadd.f32 %v1281, %v1434
        %v1474 = vadd.f32 %v1282, %v1436
        %v1475 = vadd.f32 %v1283, %v1438
        %v1476 = vadd.f32 %v1284, %v1440
        %v1477 = vadd.f32 %v1285, %v1442
        %v1478 = vadd.f32 %v1286, %v1444
        %v1479 = vadd.f32 %v1287, %v1446
        %v1480 = vadd.f32 %v1288, %v1448
        %vm1481 = vcmask 31744
        %v1482 = vsel %vm1481, %v1465, 0.0
        %v1483 = vsel %vm1481, %v1466, 0.0
        %v1484 = vsel %vm1481, %v1467, 0.0
        %v1485 = vsel %vm1481, %v1468, 0.0
        %v1486 = vsel %vm1481, %v1469, 0.0
        %v1487 = vsel %vm1481, %v1470, 0.0
        %v1488 = vsel %vm1481, %v1471, 0.0
        %v1489 = vsel %vm1481, %v1472, 0.0
        %v1490 = vsel %vm1481, %v1473, 0.0
        %v1491 = vsel %vm1481, %v1474, 0.0
        %v1492 = vsel %vm1481, %v1475, 0.0
        %v1493 = vsel %vm1481, %v1476, 0.0
        %v1494 = vsel %vm1481, %v1477, 0.0
        %v1495 = vsel %vm1481, %v1478, 0.0
        %v1496 = vsel %vm1481, %v1479, 0.0
        %v1497 = vsel %vm1481, %v1480, 0.0
        %1498 = vst [vmem:[%s317] sm:$0xff] %v1482
        %1499 = vst [vmem:[%s317 + $0x8] sm:$0xff] %v1483
        %1500 = vst [vmem:[%s317 + $0x10] sm:$0xff] %v1484
        %1501 = vst [vmem:[%s317 + $0x18] sm:$0xff] %v1485
        %1502 = vst [vmem:[%s317 + $0x20] sm:$0xff] %v1486
        %1503 = vst [vmem:[%s317 + $0x28] sm:$0xff] %v1487
        %1504 = vst [vmem:[%s317 + $0x30] sm:$0xff] %v1488
        %1505 = vst [vmem:[%s317 + $0x38] sm:$0xff] %v1489
        %1506 = vst [vmem:[%s317 + $0x40] sm:$0xff] %v1490
        %1507 = vst [vmem:[%s317 + $0x48] sm:$0xff] %v1491
        %1508 = vst [vmem:[%s317 + $0x50] sm:$0xff] %v1492
        %1509 = vst [vmem:[%s317 + $0x58] sm:$0xff] %v1493
        %1510 = vst [vmem:[%s317 + $0x60] sm:$0xff] %v1494
        %1511 = vst [vmem:[%s317 + $0x68] sm:$0xff] %v1495
        %1512 = vst [vmem:[%s317 + $0x70] sm:$0xff] %v1496
        %1513 = vst [vmem:[%s317 + $0x78] sm:$0xff] %v1497
        %s1514 = sand.u32 %s208, 1
        %s1515 = scalar_lea.sflag [#allocation3], %s1514
        %s1516 = sand.u32 %s208, 1
        %s1517 = smul.addr %s1516, 128
        %s1518 = scalar_lea.vmem [#allocation2], %s1517
        // Predicated region
        $region53: #{tpu_custom_call.1} parent=51 // pred_check
          %p1519 = pneg %p218
        $region54: #{tpu_custom_call.1} parent=51 // pred_check_branch
          %1521 = sbr.rel (%p1519) target = $region56
        $region55: #{tpu_custom_call.1} parent=51 // pred_region
          %s1522 = smul.u32 16, %s22
          %s1524 = ssub.s32 2048, 2048
          %1525 = vsyncadd %s1515, %s1524
          %s1526 = smul.addr %s1522, 128
          %s1527 = scalar_lea.hbm %s8, %s1526
          %s1528 = sshll.u32 %s1518, 4
          %s1529 = int_to_ptr.vmem [resolvable:$true] %s1528
          %1534 = dma.vmem_to_hbm [thread:$0]  %s1529, 2048, %s1527, %s1515, 128, 128, 8
        $region56: #{tpu_custom_call.1} parent=51 // pred_fallthru
          _
      $region52: #{tpu_custom_call.1} parent=5 // pred_fallthru
        _
      %p1535 = scmp.le.s32.totalorder 2, %s17
      // Predicated region
      $region57: #{tpu_custom_call.1} parent=5 // pred_check
        %p1536 = pneg %p1535
      $region58: #{tpu_custom_call.1} parent=5 // pred_check_branch
        %1538 = sbr.rel (%p1536) target = $region60
      $region59: #{tpu_custom_call.1} parent=5 // pred_region
        %s1539 = ssub.s32 %s17, 2
        // Predicated region
        $region61: #{tpu_custom_call.1} parent=59 // pred_check
          %p1540 = pneg %p224
        $region62: #{tpu_custom_call.1} parent=59 // pred_check_branch
          %1542 = sbr.rel (%p1540) target = $region64
        $region63: #{tpu_custom_call.1} parent=59 // pred_region
          %s1543 = sand.u32 %s209, 1
          %s1544 = scalar_lea.sflag [#allocation3], %s1543
          %s1545 = sand.u32 %s209, 1
          %s1546 = smul.addr %s1545, 128
          %s1547 = scalar_lea.vmem [#allocation2], %s1546
          %1548 = dma.done %s1544, 2048
        $region64: #{tpu_custom_call.1} parent=59 // pred_fallthru
          _
      $region60: #{tpu_custom_call.1} parent=5 // pred_fallthru
        _
    $region6: #{tpu_custom_call.1} parent=1 // loop_footer
      %s21 = sadd.s32 1, %s17
    $region7: #{tpu_custom_call.1} parent=1 // loop_footer_branch
      %16 = sbr.rel target = $region3
    $region8: #{tpu_custom_call.1} parent=1 // loop_exit
      _
    %1549 = vsyncpa [#allocation3], 1
    %s1550 = scalar_lea.sflag [#allocation3], 1
    %1551 = vsyncpa %s1550, 1

</llo_original>
